<compile_context>
chip_gen: v7x
topology: tpu7x:2x2x1
jax: 0.10.0
libtpu: 0.0.40
codegen_flags: <defaults>
</compile_context>

<pallas_src>
import jax
import jax.numpy as jnp
from jax.experimental import pallas as pl
from jax.experimental.pallas import tpu as pltpu


# ------------------------------ tiling helpers -------------------------------

def _round_up(x, m):
    return ((x + m - 1) // m) * m


def _pick_tile(size, cap, align):
    """Tile for a dim that will be zero-padded up to a multiple of the tile."""
    if size <= cap:
        return _round_up(size, align)
    return (cap // align) * align


def _pad2d(a, rows, cols):
    r, c = a.shape
    if r == rows and c == cols:
        return a
    return jnp.pad(a, ((0, rows - r), (0, cols - c)))


_DIM_SEM = ("parallel", "parallel", "arbitrary")
_VMEM_LIMIT = 48 * 1024 * 1024  # fits v7x (64 MiB physical) with headroom


# ------------------------------ Pallas kernels -------------------------------

def _gate_up_kernel(x_ref, w1_ref, w3_ref, h_ref, acc1_ref, acc3_ref):
    """Fused gate/up projection + SwiGLU epilogue.

    grid = (M//tm, N//tn, K//tk); K is the reduction axis (last, 'arbitrary').
    h = silu(x @ W1t) * (x @ W3t), emitted in h_ref.dtype (bf16).
    """
    k = pl.program_id(2)

    @pl.when(k == 0)
    def _():
        acc1_ref[...] = jnp.zeros_like(acc1_ref)
        acc3_ref[...] = jnp.zeros_like(acc3_ref)

    x = x_ref[...]
    acc1_ref[...] += jnp.dot(x, w1_ref[...], preferred_element_type=jnp.float32)
    acc3_ref[...] += jnp.dot(x, w3_ref[...], preferred_element_type=jnp.float32)

    @pl.when(k == pl.num_programs(2) - 1)
    def _():
        g = acc1_ref[...]
        # silu(g) = g * sigmoid(g); sigmoid goes to the EUP slot (hidden under MXU).
        h_ref[...] = (g * jax.nn.sigmoid(g) * acc3_ref[...]).astype(h_ref.dtype)


def _matmul_kernel(x_ref, w_ref, o_ref, acc_ref):
    """Standard tiled matmul with f32 accumulator (down projection w2)."""
    k = pl.program_id(2)

    @pl.when(k == 0)
    def _():
        acc_ref[...] = jnp.zeros_like(acc_ref)

    acc_ref[...] += jnp.dot(x_ref[...], w_ref[...],
                            preferred_element_type=jnp.float32)

    @pl.when(k == pl.num_programs(2) - 1)
    def _():
        o_ref[...] = acc_ref[...].astype(o_ref.dtype)


# ------------------------------ call wrappers ---------------------------------

def _choose_tiles(M, N, K, tm_cap, tn_cap, tk_cap):
    tm = _pick_tile(M, tm_cap, 16)    # bf16 sublane packing -> 16-aligned rows
    tn = _pick_tile(N, tn_cap, 128)   # lane axis
    tk = _pick_tile(K, tk_cap, 128)   # lane axis
    gm, gn, gk = pl.cdiv(M, tm), pl.cdiv(N, tn), pl.cdiv(K, tk)
    # v7x has 2 TensorCores sharding the parallel grid axes: keep >= 2 steps
    # on the N axis when the M axis collapses to a single tile (decode case).
    if gm == 1 and gn == 1 and N >= 256:
        tn = _round_up(pl.cdiv(N, 2), 128)
        gn = pl.cdiv(N, tn)
    return tm, tn, tk, gm, gn, gk


def gate_up_proj(x2d, w1t, w3t, *, tm_cap=256, tn_cap=1024, tk_cap=1024):
    """x2d: (M, K) bf16; w1t/w3t: (K, N) bf16.
    Returns silu(x@w1t) * (x@w3t), shape (M, N), bf16."""
    M, K = x2d.shape
    N = w1t.shape[1]
    tm, tn, tk, gm, gn, gk = _choose_tiles(M, N, K, tm_cap, tn_cap, tk_cap)
    Mp, Np, Kp = gm * tm, gn * tn, gk * tk

    xp = _pad2d(x2d, Mp, Kp)
    w1p = _pad2d(w1t, Kp, Np)
    w3p = _pad2d(w3t, Kp, Np)

    bpe = 2  # bf16
    cost = pl.CostEstimate(
        flops=2 * 2 * Mp * Np * Kp + 4 * Mp * Np,
        transcendentals=Mp * Np,
        bytes_accessed=(Mp * Kp + 2 * Kp * Np + Mp * Np) * bpe,
    )

    hp = pl.pallas_call(
        _gate_up_kernel,
        out_shape=jax.ShapeDtypeStruct((Mp, Np), jnp.bfloat16),
        grid_spec=pltpu.PrefetchScalarGridSpec(
            num_scalar_prefetch=0,
            grid=(gm, gn, gk),
            in_specs=[
                pl.BlockSpec((tm, tk), lambda i, j, k: (i, k)),
                pl.BlockSpec((tk, tn), lambda i, j, k: (k, j)),
                pl.BlockSpec((tk, tn), lambda i, j, k: (k, j)),
            ],
            out_specs=pl.BlockSpec((tm, tn), lambda i, j, k: (i, j)),
            scratch_shapes=[pltpu.VMEM((tm, tn), jnp.float32),
                            pltpu.VMEM((tm, tn), jnp.float32)],
        ),
        compiler_params=pltpu.CompilerParams(
            dimension_semantics=_DIM_SEM,
            vmem_limit_bytes=_VMEM_LIMIT,
        ),
        cost_estimate=cost,
    )(xp, w1p, w3p)
    return hp[:M, :N]


def down_proj(h2d, w2t, *, out_dtype=None, tm_cap=256, tn_cap=1024, tk_cap=1024):
    """h2d: (M, K) bf16; w2t: (K, N) bf16.  Returns h2d @ w2t, shape (M, N)."""
    M, K = h2d.shape
    N = w2t.shape[1]
    out_dtype = h2d.dtype if out_dtype is None else out_dtype
    tm, tn, tk, gm, gn, gk = _choose_tiles(M, N, K, tm_cap, tn_cap, tk_cap)
    Mp, Np, Kp = gm * tm, gn * tn, gk * tk

    hp = _pad2d(h2d, Mp, Kp)
    w2p = _pad2d(w2t, Kp, Np)

    cost = pl.CostEstimate(
        flops=2 * Mp * Np * Kp,
        transcendentals=0,
        bytes_accessed=(Mp * Kp + Kp * Np) * 2 + Mp * Np * jnp.dtype(out_dtype).itemsize,
    )

    op = pl.pallas_call(
        _matmul_kernel,
        out_shape=jax.ShapeDtypeStruct((Mp, Np), out_dtype),
        grid_spec=pltpu.PrefetchScalarGridSpec(
            num_scalar_prefetch=0,
            grid=(gm, gn, gk),
            in_specs=[
                pl.BlockSpec((tm, tk), lambda i, j, k: (i, k)),
                pl.BlockSpec((tk, tn), lambda i, j, k: (k, j)),
            ],
            out_specs=pl.BlockSpec((tm, tn), lambda i, j, k: (i, j)),
            scratch_shapes=[pltpu.VMEM((tm, tn), jnp.float32)],
        ),
        compiler_params=pltpu.CompilerParams(
            dimension_semantics=_DIM_SEM,
            vmem_limit_bytes=_VMEM_LIMIT,
        ),
        cost_estimate=cost,
    )(hp, w2p)
    return op[:M, :N]


# --------------------------------- module -------------------------------------

class FeedForwardPallas:
    """Mirrors the PyTorch FeedForward module (SwiGLU).

    Weights stored pre-transposed (in_features, out_features) in bf16; all
    matmuls accumulate in f32."""

    def __init__(self, key, dim, hidden_dim, multiple_of, ffn_dim_multiplier,
                 param_dtype=jnp.bfloat16):
        # Exactly the hidden_dim arithmetic from the PyTorch spec.
        hidden_dim = int(2 * hidden_dim / 3)
        if ffn_dim_multiplier is not None:
            hidden_dim = int(ffn_dim_multiplier * hidden_dim)
        hidden_dim = multiple_of * ((hidden_dim + multiple_of - 1) // multiple_of)
        self.dim = dim
        self.hidden_dim = hidden_dim
        self.param_dtype = param_dtype

        k1, k2, k3 = jax.random.split(key, 3)
        init = lambda k, shape: (
            0.02 * jax.random.normal(k, shape, jnp.float32)).astype(param_dtype)
        # Stored as (in_features, out_features): no runtime transpose needed.
        self.w1t = init(k1, (dim, hidden_dim))    # == nn.Linear(dim, hidden).weight.T
        self.w2t = init(k2, (hidden_dim, dim))    # == nn.Linear(hidden, dim).weight.T
        self.w3t = init(k3, (dim, hidden_dim))    # == nn.Linear(dim, hidden).weight.T

    def __call__(self, x):
        B, S, D = x.shape
        x2d = x.reshape(B * S, D).astype(self.param_dtype)
        h = gate_up_proj(x2d, self.w1t, self.w3t)          # fused w1/w3 + SwiGLU (bf16 out)
        out = down_proj(h, self.w2t, out_dtype=x.dtype)     # w2, f32 accumulate
        return out.reshape(B, S, D)


# ---------------------------- pure-JAX reference -------------------------------

def reference_forward(x, ffn):
    """f32 reference that mirrors the kernel's dtype path (bf16 inputs/weights/h,
    f32 accumulation)."""
    f32 = jnp.float32
    xb = x.astype(jnp.bfloat16).astype(f32)
    w1 = ffn.w1t.astype(f32)
    w2 = ffn.w2t.astype(f32)
    w3 = ffn.w3t.astype(f32)
    h = jax.nn.silu(xb @ w1) * (xb @ w3)
    h = h.astype(jnp.bfloat16).astype(f32)
    return h @ w2


# ------------------------------------ main -------------------------------------

if __name__ == "__main__":
    # Small shapes, kept MXU/(8,128)-friendly:
    #   dim=128, hidden_dim arg 512 -> int(2*512/3)=341 -> round to 128 -> 384
    dim = 128
    hidden_dim_arg = 512
    multiple_of = 128
    ffn_dim_multiplier = None
    bsz, seqlen = 2, 8

    key = jax.random.PRNGKey(0)
    kx, kp = jax.random.split(key)
    x = jax.random.normal(kx, (bsz, seqlen, dim), jnp.float32)

    ffn = FeedForwardPallas(kp, dim, hidden_dim_arg, multiple_of, ffn_dim_multiplier)
    assert ffn.hidden_dim == 384

    out = ffn(x)
    out = jax.block_until_ready(out)

    ref = reference_forward(x, ffn)
    assert out.shape == (bsz, seqlen, dim)
    assert jnp.allclose(out.astype(jnp.float32), ref, atol=1e-2, rtol=1e-2), \
        "mismatch vs reference"
    print("KERNEL_OK")
</pallas_src>

<mosaic_0001>
module attributes {stable_mosaic.version = 11 : i64} {
  func.func @_gate_up_kernel(%arg0: i32, %arg1: i32, %arg2: i32, %arg3: memref<16x128xbf16, #tpu.memory_space<vmem>>, %arg4: memref<128x256xbf16, #tpu.memory_space<vmem>>, %arg5: memref<128x256xbf16, #tpu.memory_space<vmem>>, %arg6: memref<16x256xbf16, #tpu.memory_space<vmem>>, %arg7: memref<16x256xf32, #tpu.memory_space<vmem>>, %arg8: memref<16x256xf32, #tpu.memory_space<vmem>>) attributes {dimension_semantics = [#tpu.dimension_semantics<parallel>, #tpu.dimension_semantics<parallel>, #tpu.dimension_semantics<arbitrary>], iteration_bounds = array<i64: 1, 2, 1>, scalar_prefetch = 0 : i64, scratch_operands = 2 : i64, tpu.core_type = #tpu.core_type<tc>, window_params = [{transform_indices = @transform_0, window_bounds = array<i64: 16, 128>}, {transform_indices = @transform_1, window_bounds = array<i64: 128, 256>}, {transform_indices = @transform_2, window_bounds = array<i64: 128, 256>}, {transform_indices = @transform_3, window_bounds = array<i64: 16, 256>}]} {
    %c0_i32 = arith.constant 0 : i32
    %0 = arith.cmpi eq, %arg2, %c0_i32 : i32
    %1 = arith.extui %0 : i1 to i32
    %c0_i32_0 = arith.constant 0 : i32
    %2 = arith.cmpi ne, %1, %c0_i32_0 : i32
    scf.if %2 {
      %cst_17 = arith.constant 0.000000e+00 : f32
      %17 = vector.broadcast %cst_17 : f32 to vector<16x256xf32>
      %c0_18 = arith.constant 0 : index
      %c0_19 = arith.constant 0 : index
      %18 = vector.load %arg7[%c0_18, %c0_19] : memref<16x256xf32, #tpu.memory_space<vmem>>, vector<16x256xf32>
      tpu.vector_store %arg7[%c0_18, %c0_19], %17 {strides = array<i32>} : memref<16x256xf32, #tpu.memory_space<vmem>>, vector<16x256xf32>,
      %cst_20 = arith.constant 0.000000e+00 : f32
      %19 = vector.broadcast %cst_20 : f32 to vector<16x256xf32>
      %c0_21 = arith.constant 0 : index
      %c0_22 = arith.constant 0 : index
      %20 = vector.load %arg8[%c0_21, %c0_22] : memref<16x256xf32, #tpu.memory_space<vmem>>, vector<16x256xf32>
      tpu.vector_store %arg8[%c0_21, %c0_22], %19 {strides = array<i32>} : memref<16x256xf32, #tpu.memory_space<vmem>>, vector<16x256xf32>,
    } else {
    }
    %c0 = arith.constant 0 : index
    %c0_1 = arith.constant 0 : index
    %3 = vector.load %arg3[%c0, %c0_1] : memref<16x128xbf16, #tpu.memory_space<vmem>>, vector<16x128xbf16>
    %c0_2 = arith.constant 0 : index
    %c0_3 = arith.constant 0 : index
    %4 = vector.load %arg7[%c0_2, %c0_3] : memref<16x256xf32, #tpu.memory_space<vmem>>, vector<16x256xf32>
    %c0_4 = arith.constant 0 : index
    %c0_5 = arith.constant 0 : index
    %5 = vector.load %arg4[%c0_4, %c0_5] : memref<128x256xbf16, #tpu.memory_space<vmem>>, vector<128x256xbf16>
    %cst = arith.constant dense<0.000000e+00> : vector<16x256xf32>
    %6 = tpu.matmul %3, %5, %cst {dimension_numbers = #tpu.dot_dimension_numbers<[1], [0], [0], [1], [0, 0, 1, 1], [], []>} : vector<16x128xbf16>, vector<128x256xbf16>, vector<16x256xf32> -> vector<16x256xf32>
    %7 = arith.addf %4, %6 : vector<16x256xf32>
    %c0_6 = arith.constant 0 : index
    %c0_7 = arith.constant 0 : index
    %8 = vector.load %arg7[%c0_6, %c0_7] : memref<16x256xf32, #tpu.memory_space<vmem>>, vector<16x256xf32>
    tpu.vector_store %arg7[%c0_6, %c0_7], %7 {strides = array<i32>} : memref<16x256xf32, #tpu.memory_space<vmem>>, vector<16x256xf32>,
    %c0_8 = arith.constant 0 : index
    %c0_9 = arith.constant 0 : index
    %9 = vector.load %arg8[%c0_8, %c0_9] : memref<16x256xf32, #tpu.memory_space<vmem>>, vector<16x256xf32>
    %c0_10 = arith.constant 0 : index
    %c0_11 = arith.constant 0 : index
    %10 = vector.load %arg5[%c0_10, %c0_11] : memref<128x256xbf16, #tpu.memory_space<vmem>>, vector<128x256xbf16>
    %cst_12 = arith.constant dense<0.000000e+00> : vector<16x256xf32>
    %11 = tpu.matmul %3, %10, %cst_12 {dimension_numbers = #tpu.dot_dimension_numbers<[1], [0], [0], [1], [0, 0, 1, 1], [], []>} : vector<16x128xbf16>, vector<128x256xbf16>, vector<16x256xf32> -> vector<16x256xf32>
    %12 = arith.addf %9, %11 : vector<16x256xf32>
    %c0_13 = arith.constant 0 : index
    %c0_14 = arith.constant 0 : index
    %13 = vector.load %arg8[%c0_13, %c0_14] : memref<16x256xf32, #tpu.memory_space<vmem>>, vector<16x256xf32>
    tpu.vector_store %arg8[%c0_13, %c0_14], %12 {strides = array<i32>} : memref<16x256xf32, #tpu.memory_space<vmem>>, vector<16x256xf32>,
    %c0_i32_15 = arith.constant 0 : i32
    %14 = arith.cmpi eq, %arg2, %c0_i32_15 : i32
    %15 = arith.extui %14 : i1 to i32
    %c0_i32_16 = arith.constant 0 : i32
    %16 = arith.cmpi ne, %15, %c0_i32_16 : i32
    scf.if %16 {
      %c0_17 = arith.constant 0 : index
      %c0_18 = arith.constant 0 : index
      %17 = vector.load %arg7[%c0_17, %c0_18] : memref<16x256xf32, #tpu.memory_space<vmem>>, vector<16x256xf32>
      %18 = arith.negf %17 : vector<16x256xf32>
      %19 = math.exp %18 : vector<16x256xf32>
      %cst_19 = arith.constant 1.000000e+00 : f32
      %20 = vector.broadcast %cst_19 : f32 to vector<16x256xf32>
      %21 = arith.addf %20, %19 : vector<16x256xf32>
      %22 = arith.divf %20, %21 : vector<16x256xf32>
      %23 = arith.mulf %17, %22 : vector<16x256xf32>
      %c0_20 = arith.constant 0 : index
      %c0_21 = arith.constant 0 : index
      %24 = vector.load %arg8[%c0_20, %c0_21] : memref<16x256xf32, #tpu.memory_space<vmem>>, vector<16x256xf32>
      %25 = arith.mulf %23, %24 : vector<16x256xf32>
      %26 = arith.truncf %25 : vector<16x256xf32> to vector<16x256xbf16>
      %c0_22 = arith.constant 0 : index
      %c0_23 = arith.constant 0 : index
      %27 = vector.load %arg6[%c0_22, %c0_23] : memref<16x256xbf16, #tpu.memory_space<vmem>>, vector<16x256xbf16>
      tpu.vector_store %arg6[%c0_22, %c0_23], %26 {strides = array<i32>} : memref<16x256xbf16, #tpu.memory_space<vmem>>, vector<16x256xbf16>,
    } else {
    }
    return
  }
  func.func @transform_0(%arg0: i32, %arg1: i32, %arg2: i32) -> (i32, i32) {
    %c0_i32 = arith.constant 0 : i32
    return %arg0, %arg2 : i32, i32
  }
  func.func @transform_1(%arg0: i32, %arg1: i32, %arg2: i32) -> (i32, i32) {
    %c0_i32 = arith.constant 0 : i32
    return %arg2, %arg1 : i32, i32
  }
  func.func @transform_2(%arg0: i32, %arg1: i32, %arg2: i32) -> (i32, i32) {
    %c0_i32 = arith.constant 0 : i32
    return %arg2, %arg1 : i32, i32
  }
  func.func @transform_3(%arg0: i32, %arg1: i32, %arg2: i32) -> (i32, i32) {
    %c0_i32 = arith.constant 0 : i32
    return %arg0, %arg1 : i32, i32
  }
}

</mosaic_0001>

<llo_original>
// kernel: tpu_custom_call.1
$region0: #{tpu_custom_call.1}
  #allocation0 [shape = 'u32[]', space=smem, size = 0x4, offset = 0x4, fixed_abs, tag = 'smem constant byte address 0x4 - core index']
  #allocation1 [shape = 'u32[144,128]{1,0:T(1,128)}', space=vmem, size = 0x12000, scoped, tag = 'internal scratch']
  #allocation2 [shape = 'f32[16,256]{1,0:T(8,128)}', space=vmem, size = 0x4000, scoped, tag = 'scratch operand']
  #allocation3 [shape = 'f32[16,256]{1,0:T(8,128)}', space=vmem, size = 0x4000, scoped, tag = 'scratch operand']
  %s0 = inlined_call_operand.hbm [shape: bf16[16,128], index: 0, kind: input, shape index: {}]
  %s1 = inlined_call_operand.hbm [shape: bf16[128,512], index: 1, kind: input, shape index: {}]
  %s2 = inlined_call_operand.hbm [shape: bf16[128,512], index: 2, kind: input, shape index: {}]
  %s3 = inlined_call_operand.hbm [shape: bf16[16,512], index: 3, kind: output, shape index: {}]
  %s4 = sld [smem:[#allocation0]]
  $region65: #{tpu_custom_call.1} parent=0
    _
  %s6 = ssub.s32 1, %s4
  %s7 = scalar_select 0, %s6, %s4
  $region1: #{tpu_custom_call.1} parent=0
    #allocation4 [shape = 'u8[4096]{0}', space=vmem, size = 0x1000, scoped, tag = 'input window, operand 0, single buffered']
    #allocation5 [shape = 's32[2]{0}', space=sflag, size = 0x8, scoped, tag = 'scoped memory for tpu_custom_call.1']
    #allocation6 [shape = 's32[2]{0}', space=sflag, size = 0x8, scoped, tag = 'scoped memory for tpu_custom_call.1']
    #allocation7 [shape = 'u8[131072]{0}', space=vmem, size = 0x20000, scoped, tag = 'input window, operand 1']
    #allocation8 [shape = 's32[2]{0}', space=sflag, size = 0x8, scoped, tag = 'scoped memory for tpu_custom_call.1']
    #allocation9 [shape = 'u8[131072]{0}', space=vmem, size = 0x20000, scoped, tag = 'input window, operand 2']
    #allocation10 [shape = 'u8[16384]{0}', space=vmem, size = 0x4000, scoped, tag = 'output window, operand 0']
    %8 = vsyncpa [#allocation5], 0
    %9 = vsyncpa [#allocation8], 0
    %s10 = scalar_lea.sflag [#allocation8], 1
    %11 = vsyncpa %s10, 0
    %12 = vsyncpa [#allocation6], 0
    %s13 = scalar_lea.sflag [#allocation6], 1
    %14 = vsyncpa %s13, 0
    loop: start=0, step=1, limit=4
    $region2: #{tpu_custom_call.1} parent=1 // loop_pre_header
      _
    $region3: #{tpu_custom_call.1} parent=1 // loop_header
      %s16 = sphi 0, %s20
      %p17 = scmp.ge.s32.totalorder %s16, 4
      %s23 = sphi 0, %s42
      %s24 = sphi 0, %s38
      %s25 = sphi 0, %s34
      %s26 = sphi 0, %s23
      %s27 = sphi 0, %s24
      %s28 = sphi 0, %s25
      %s29 = sphi 0, %s26
      %s30 = sphi 0, %s27
      %s31 = sphi 0, %s28
      %s47 = sphi 0, %s49
      %s50 = sphi 0, %s47
      %s51 = sphi 0, %s50
      %s67 = sphi 0, %s51
      %s75 = sphi 0, %s77
      %s78 = sphi 0, %s75
      %s79 = sphi 0, %s78
      %s95 = sphi 0, %s79
      %s103 = sphi 0, %s105
      %s106 = sphi 0, %s103
      %s107 = sphi 0, %s106
      %s123 = sphi 0, %s107
      %s131 = sphi 0, %s133
      %s134 = sphi 0, %s131
      %s135 = sphi 0, %s134
      %s151 = sphi 0, %s135
    $region4: #{tpu_custom_call.1} parent=1 // loop_header_branch
      %19 = sbr.rel (%p17) target = $region8
    $region5: #{tpu_custom_call.1} parent=1 // loop_body
      %s21 = ssub.s32 %s16, 1
      %s22 = ssub.s32 %s16, 2
      %s32 = sadd.s32 1, %s25
      %p33 = scmp.ge.s32.totalorder %s32, 1
      %s34 = scalar_select %p33, 0, %s32
      %s35 = sadd.s32 1, %s24
      %s36 = scalar_select %p33, %s35, %s24
      %p37 = scmp.ge.s32.totalorder %s36, 2
      %s38 = scalar_select %p37, 0, %s36
      %s39 = sadd.s32 1, %s23
      %s40 = scalar_select %p37, %s39, %s23
      %p41 = scmp.ge.s32.totalorder %s40, 1
      %s42 = scalar_select %p41, 0, %s40
      %s43 = ssub.s32 %s23, %s42
      %s44 = ssub.s32 %s25, %s34
      %s45 = sor.u32 %s43, %s44
      %p46 = scmp.eq.s32.totalorder %s45, 0
      %s48 = sadd.s32 %s47, 1
      %s49 = scalar_select %p46, %s47, %s48
      %p52 = pneg %p46
      %p53 = scmp.eq.s32.totalorder %s16, 1
      %p54 = por %p52, %p53
      %p55 = scmp.ne.s32.totalorder %s47, %s50
      %p56 = scmp.eq.s32.totalorder %s16, 0
      %p57 = por %p55, %p56
      %p58 = scmp.ne.s32.totalorder %s47, %s50
      %p59 = scmp.eq.s32.totalorder %s21, 1
      %p60 = por %p58, %p59
      %p61 = scmp.ne.s32.totalorder %s50, %s51
      %p62 = scmp.eq.s32.totalorder %s21, 0
      %p63 = por %p61, %p62
      %p64 = scmp.ne.s32.totalorder %s50, %s51
      %p65 = scmp.eq.s32.totalorder %s22, 1
      %p66 = por %p64, %p65
      %p68 = scmp.ne.s32.totalorder %s51, %s67
      %p69 = scmp.eq.s32.totalorder %s22, 0
      %p70 = por %p68, %p69
      %s71 = ssub.s32 %s25, %s34
      %s72 = ssub.s32 %s24, %s38
      %s73 = sor.u32 %s71, %s72
      %p74 = scmp.eq.s32.totalorder %s73, 0
      %s76 = sadd.s32 %s75, 1
      %s77 = scalar_select %p74, %s75, %s76
      %p80 = pneg %p74
      %p81 = scmp.eq.s32.totalorder %s16, 1
      %p82 = por %p80, %p81
      %p83 = scmp.ne.s32.totalorder %s75, %s78
      %p84 = scmp.eq.s32.totalorder %s16, 0
      %p85 = por %p83, %p84
      %p86 = scmp.ne.s32.totalorder %s75, %s78
      %p87 = scmp.eq.s32.totalorder %s21, 1
      %p88 = por %p86, %p87
      %p89 = scmp.ne.s32.totalorder %s78, %s79
      %p90 = scmp.eq.s32.totalorder %s21, 0
      %p91 = por %p89, %p90
      %p92 = scmp.ne.s32.totalorder %s78, %s79
      %p93 = scmp.eq.s32.totalorder %s22, 1
      %p94 = por %p92, %p93
      %p96 = scmp.ne.s32.totalorder %s79, %s95
      %p97 = scmp.eq.s32.totalorder %s22, 0
      %p98 = por %p96, %p97
      %s99 = ssub.s32 %s25, %s34
      %s100 = ssub.s32 %s24, %s38
      %s101 = sor.u32 %s99, %s100
      %p102 = scmp.eq.s32.totalorder %s101, 0
      %s104 = sadd.s32 %s103, 1
      %s105 = scalar_select %p102, %s103, %s104
      %p108 = pneg %p102
      %p109 = scmp.eq.s32.totalorder %s16, 1
      %p110 = por %p108, %p109
      %p111 = scmp.ne.s32.totalorder %s103, %s106
      %p112 = scmp.eq.s32.totalorder %s16, 0
      %p113 = por %p111, %p112
      %p114 = scmp.ne.s32.totalorder %s103, %s106
      %p115 = scmp.eq.s32.totalorder %s21, 1
      %p116 = por %p114, %p115
      %p117 = scmp.ne.s32.totalorder %s106, %s107
      %p118 = scmp.eq.s32.totalorder %s21, 0
      %p119 = por %p117, %p118
      %p120 = scmp.ne.s32.totalorder %s106, %s107
      %p121 = scmp.eq.s32.totalorder %s22, 1
      %p122 = por %p120, %p121
      %p124 = scmp.ne.s32.totalorder %s107, %s123
      %p125 = scmp.eq.s32.totalorder %s22, 0
      %p126 = por %p124, %p125
      %s127 = ssub.s32 %s23, %s42
      %s128 = ssub.s32 %s24, %s38
      %s129 = sor.u32 %s127, %s128
      %p130 = scmp.eq.s32.totalorder %s129, 0
      %s132 = sadd.s32 %s131, 1
      %s133 = scalar_select %p130, %s131, %s132
      %p136 = pneg %p130
      %p137 = scmp.eq.s32.totalorder %s16, 1
      %p138 = por %p136, %p137
      %p139 = scmp.ne.s32.totalorder %s131, %s134
      %p140 = scmp.eq.s32.totalorder %s16, 0
      %p141 = por %p139, %p140
      %p142 = scmp.ne.s32.totalorder %s131, %s134
      %p143 = scmp.eq.s32.totalorder %s21, 1
      %p144 = por %p142, %p143
      %p145 = scmp.ne.s32.totalorder %s134, %s135
      %p146 = scmp.eq.s32.totalorder %s21, 0
      %p147 = por %p145, %p146
      %p148 = scmp.ne.s32.totalorder %s134, %s135
      %p149 = scmp.eq.s32.totalorder %s22, 1
      %p150 = por %p148, %p149
      %p152 = scmp.ne.s32.totalorder %s135, %s151
      %p153 = scmp.eq.s32.totalorder %s22, 0
      %p154 = por %p152, %p153
      %p155 = scmp.le.s32.totalorder 1, %s16
      %p156 = scmp.lt.s32.totalorder %s16, 3
      %p157 = pnand %p155, %p156
      %p158 = pneg %p157
      // Predicated region
      $region9: #{tpu_custom_call.1} parent=5 // pred_check
        _
      $region10: #{tpu_custom_call.1} parent=5 // pred_check_branch
        %160 = sbr.rel (%p157) target = $region12
      $region11: #{tpu_custom_call.1} parent=5 // pred_region
        %s161 = ssub.s32 %s16, 1
        // Predicated region
        $region13: #{tpu_custom_call.1} parent=11 // pred_check
          %p162 = pneg %p63
        $region14: #{tpu_custom_call.1} parent=11 // pred_check_branch
          %164 = sbr.rel (%p162) target = $region16
        $region15: #{tpu_custom_call.1} parent=11 // pred_region
          %s165 = smul.u32 2, %s26
          %s167 = ssub.s32 128, 128
          %168 = vsyncadd [#allocation5], %s167
          %s169 = sadd.s32 %s28, %s165
          %s170 = smul.addr %s169, 64
          %s171 = scalar_lea.hbm %s0, %s170
          %s172 = sshll.u32 [#allocation4], 4
          %s173 = int_to_ptr.vmem [resolvable:$true] %s172
          %178 = dma.hbm_to_vmem [thread:$0]  %s171, 128, %s173, [#allocation5], 64, 64, 4
        $region16: #{tpu_custom_call.1} parent=11 // pred_fallthru
          _
      $region12: #{tpu_custom_call.1} parent=5 // pred_fallthru
        _
      %p179 = scmp.lt.s32.totalorder %s16, 2
      // Predicated region
      $region17: #{tpu_custom_call.1} parent=5 // pred_check
        %p180 = pneg %p179
      $region18: #{tpu_custom_call.1} parent=5 // pred_check_branch
        %182 = sbr.rel (%p180) target = $region20
      $region19: #{tpu_custom_call.1} parent=5 // pred_region
        // Predicated region
        $region21: #{tpu_custom_call.1} parent=19 // pred_check
          %p183 = pneg %p85
        $region22: #{tpu_custom_call.1} parent=19 // pred_check_branch
          %185 = sbr.rel (%p183) target = $region24
        $region23: #{tpu_custom_call.1} parent=19 // pred_region
          %s186 = sand.u32 %s16, 1
          %s187 = scalar_lea.sflag [#allocation8], %s186
          %s188 = sand.u32 %s75, 1
          %s189 = smul.addr %s188, 128
          %s190 = scalar_lea.vmem [#allocation7], %s189
          %s191 = smul.u32 16, %s25
          %s192 = smul.u32 2, %s24
          %s194 = ssub.s32 2048, 2048
          %195 = vsyncadd %s187, %s194
          %s196 = smul.addr %s191, 4
          %s197 = sadd.s32 %s192, %s196
          %s198 = smul.addr %s197, 64
          %s199 = scalar_lea.hbm %s1, %s198
          %s200 = sshll.u32 %s190, 4
          %s201 = int_to_ptr.vmem [resolvable:$true] %s200
          %206 = dma.hbm_to_vmem [thread:$0]  %s199, 2048, %s201, %s187, 256, 128, 8
        $region24: #{tpu_custom_call.1} parent=19 // pred_fallthru
          _
        // Predicated region
        $region25: #{tpu_custom_call.1} parent=19 // pred_check
          %p207 = pneg %p113
        $region26: #{tpu_custom_call.1} parent=19 // pred_check_branch
          %209 = sbr.rel (%p207) target = $region28
        $region27: #{tpu_custom_call.1} parent=19 // pred_region
          %s210 = sand.u32 %s16, 1
          %s211 = scalar_lea.sflag [#allocation8], %s210
          %s212 = sand.u32 %s103, 1
          %s213 = smul.addr %s212, 128
          %s214 = scalar_lea.vmem [#allocation9], %s213
          %s215 = smul.u32 16, %s25
          %s216 = smul.u32 2, %s24
          %s218 = ssub.s32 2048, 2048
          %219 = vsyncadd %s211, %s218
          %s220 = smul.addr %s215, 4
          %s221 = sadd.s32 %s216, %s220
          %s222 = smul.addr %s221, 64
          %s223 = scalar_lea.hbm %s2, %s222
          %s224 = sshll.u32 %s214, 4
          %s225 = int_to_ptr.vmem [resolvable:$true] %s224
          %230 = dma.hbm_to_vmem [thread:$0]  %s223, 2048, %s225, %s211, 256, 128, 8
        $region28: #{tpu_custom_call.1} parent=19 // pred_fallthru
          _
      $region20: #{tpu_custom_call.1} parent=5 // pred_fallthru
        _
      %p231 = scmp.le.s32.totalorder 1, %s16
      %p232 = scmp.lt.s32.totalorder %s16, 3
      %p233 = pnand %p231, %p232
      %p234 = pneg %p233
      // Predicated region
      $region29: #{tpu_custom_call.1} parent=5 // pred_check
        _
      $region30: #{tpu_custom_call.1} parent=5 // pred_check_branch
        %236 = sbr.rel (%p233) target = $region32
      $region31: #{tpu_custom_call.1} parent=5 // pred_region
        %s237 = ssub.s32 %s16, 1
        // Predicated region
        $region33: #{tpu_custom_call.1} parent=31 // pred_check
          %p238 = pneg %p63
        $region34: #{tpu_custom_call.1} parent=31 // pred_check_branch
          %240 = sbr.rel (%p238) target = $region36
        $region35: #{tpu_custom_call.1} parent=31 // pred_region
          %241 = dma.done [#allocation5], 128
        $region36: #{tpu_custom_call.1} parent=31 // pred_fallthru
          _
        %s242 = sand.u32 %s21, 1
        %s243 = scalar_lea.sflag [#allocation8], %s242
        %s244 = sand.u32 %s78, 1
        %s245 = smul.addr %s244, 128
        %s246 = scalar_lea.vmem [#allocation7], %s245
        // Predicated region
        $region37: #{tpu_custom_call.1} parent=31 // pred_check
          %p247 = pneg %p91
        $region38: #{tpu_custom_call.1} parent=31 // pred_check_branch
          %249 = sbr.rel (%p247) target = $region40
        $region39: #{tpu_custom_call.1} parent=31 // pred_region
          %250 = dma.done %s243, 2048
        $region40: #{tpu_custom_call.1} parent=31 // pred_fallthru
          _
        %s251 = sand.u32 %s21, 1
        %s252 = scalar_lea.sflag [#allocation8], %s251
        %s253 = sand.u32 %s106, 1
        %s254 = smul.addr %s253, 128
        %s255 = scalar_lea.vmem [#allocation9], %s254
        // Predicated region
        $region41: #{tpu_custom_call.1} parent=31 // pred_check
          %p256 = pneg %p119
        $region42: #{tpu_custom_call.1} parent=31 // pred_check_branch
          %258 = sbr.rel (%p256) target = $region44
        $region43: #{tpu_custom_call.1} parent=31 // pred_region
          %259 = dma.done %s252, 2048
        $region44: #{tpu_custom_call.1} parent=31 // pred_fallthru
          _
        %p260 = pneg %p63
        %p261 = pneg %p60
        %s262 = sand.u32 %s21, 1
        %s263 = scalar_lea.sflag [#allocation8], %s262
        %s264 = sand.u32 %s78, 1
        %s265 = smul.addr %s264, 128
        %s266 = scalar_lea.vmem [#allocation7], %s265
        %p267 = pneg %p91
        %p268 = pneg %p88
        %s269 = sand.u32 %s21, 1
        %s270 = scalar_lea.sflag [#allocation8], %s269
        %s271 = sand.u32 %s106, 1
        %s272 = smul.addr %s271, 128
        %s273 = scalar_lea.vmem [#allocation9], %s272
        %p274 = pneg %p119
        %p275 = pneg %p116
        %p276 = pneg %p147
        %p277 = pneg %p144
        %s278 = sand.u32 %s134, 1
        %s279 = scalar_lea.sflag [#allocation6], %s278
        %s280 = sand.u32 %s134, 1
        %s281 = smul.addr %s280, 16
        %s282 = scalar_lea.vmem [#allocation10], %s281
        %s283 = smul.u32 2, %s26
        %s284 = smul.u32 16, %s28
        %s285 = smul.u32 2, %s27
        %s286 = smul.u32 16, %s28
        %s287 = smul.u32 2, %s27
        %s288 = smul.u32 2, %s26
        %s289 = smul.u32 2, %s27
        %p291 = scmp.eq.s32.totalorder %s28, 0
        // Predicated region
        $region45: #{tpu_custom_call.1} parent=31 // pred_check
          %p292 = pneg %p291
        $region46: #{tpu_custom_call.1} parent=31 // pred_check_branch
          %294 = sbr.rel (%p292) target = $region48
        $region47: #{tpu_custom_call.1} parent=31 // pred_region
          %295 = vst [vmem:[#allocation2] sm:$0xff] 0.0
          %296 = vst [vmem:[#allocation2 + $0x8] sm:$0xff] 0.0
          %297 = vst [vmem:[#allocation2 + $0x10] sm:$0xff] 0.0
          %298 = vst [vmem:[#allocation2 + $0x18] sm:$0xff] 0.0
          %299 = vst [vmem:[#allocation3] sm:$0xff] 0.0
          %300 = vst [vmem:[#allocation3 + $0x8] sm:$0xff] 0.0
          %301 = vst [vmem:[#allocation3 + $0x10] sm:$0xff] 0.0
          %302 = vst [vmem:[#allocation3 + $0x18] sm:$0xff] 0.0
        $region48: #{tpu_custom_call.1} parent=31 // pred_fallthru
          _
        %v303 = vld [vmem:[#allocation4] sm:$0xf]
        %v304 = vld [vmem:[#allocation4 + $0x4] sm:$0xf]
        %v305 = vld [vmem:[#allocation2] sm:$0xff]
        %v306 = vld [vmem:[#allocation2 + $0x8] sm:$0xff]
        %v307 = vld [vmem:[#allocation2 + $0x10] sm:$0xff]
        %v308 = vld [vmem:[#allocation2 + $0x18] sm:$0xff]
        %v309 = vld [vmem:[%s246] sm:$0xff]
        %v310 = vld [vmem:[%s246 + $0x8] sm:$0xff]
        %v311 = vld [vmem:[%s246 + $0x10] sm:$0xff]
        %v312 = vld [vmem:[%s246 + $0x18] sm:$0xff]
        %v313 = vld [vmem:[%s246 + $0x20] sm:$0xff]
        %v314 = vld [vmem:[%s246 + $0x28] sm:$0xff]
        %v315 = vld [vmem:[%s246 + $0x30] sm:$0xff]
        %v316 = vld [vmem:[%s246 + $0x38] sm:$0xff]
        %v317 = vld [vmem:[%s246 + $0x40] sm:$0xff]
        %v318 = vld [vmem:[%s246 + $0x48] sm:$0xff]
        %v319 = vld [vmem:[%s246 + $0x50] sm:$0xff]
        %v320 = vld [vmem:[%s246 + $0x58] sm:$0xff]
        %v321 = vld [vmem:[%s246 + $0x60] sm:$0xff]
        %v322 = vld [vmem:[%s246 + $0x68] sm:$0xff]
        %v323 = vld [vmem:[%s246 + $0x70] sm:$0xff]
        %v324 = vld [vmem:[%s246 + $0x78] sm:$0xff]
        %v327 = vunpack.c.l.b16 %v303
        %v328 = vunpack.c.l.b16 %v304
        %v329 = vpack.c.b16 %v328, %v327
        %v347 = vunpack.c.l.b16 %v309
        %v348 = vunpack.c.h.b16 %v309
        %v349 = vunpack.c.l.b16 %v310
        %v350 = vunpack.c.h.b16 %v310
        %v351 = vunpack.c.l.b16 %v311
        %v352 = vunpack.c.h.b16 %v311
        %v353 = vunpack.c.l.b16 %v312
        %v354 = vunpack.c.h.b16 %v312
        %v355 = vunpack.c.l.b16 %v313
        %v356 = vunpack.c.h.b16 %v313
        %v357 = vunpack.c.l.b16 %v314
        %v358 = vunpack.c.h.b16 %v314
        %v359 = vunpack.c.l.b16 %v315
        %v360 = vunpack.c.h.b16 %v315
        %v361 = vunpack.c.l.b16 %v316
        %v362 = vunpack.c.h.b16 %v316
        %v363 = vunpack.c.l.b16 %v317
        %v364 = vunpack.c.h.b16 %v317
        %v365 = vunpack.c.l.b16 %v318
        %v366 = vunpack.c.h.b16 %v318
        %v367 = vunpack.c.l.b16 %v319
        %v368 = vunpack.c.h.b16 %v319
        %v369 = vunpack.c.l.b16 %v320
        %v370 = vunpack.c.h.b16 %v320
        %v371 = vunpack.c.l.b16 %v321
        %v372 = vunpack.c.h.b16 %v321
        %v373 = vunpack.c.l.b16 %v322
        %v374 = vunpack.c.h.b16 %v322
        %v375 = vunpack.c.l.b16 %v323
        %v376 = vunpack.c.h.b16 %v323
        %v377 = vunpack.c.l.b16 %v324
        %v378 = vunpack.c.h.b16 %v324
        %v379 = vpack.c.b16 %v349, %v347
        %v380 = vpack.c.b16 %v350, %v348
        %v381 = vpack.c.b16 %v353, %v351
        %v382 = vpack.c.b16 %v354, %v352
        %v383 = vpack.c.b16 %v357, %v355
        %v384 = vpack.c.b16 %v358, %v356
        %v385 = vpack.c.b16 %v361, %v359
        %v386 = vpack.c.b16 %v362, %v360
        %v387 = vpack.c.b16 %v365, %v363
        %v388 = vpack.c.b16 %v366, %v364
        %v389 = vpack.c.b16 %v369, %v367
        %v390 = vpack.c.b16 %v370, %v368
        %v391 = vpack.c.b16 %v373, %v371
        %v392 = vpack.c.b16 %v374, %v372
        %v393 = vpack.c.b16 %v377, %v375
        %v394 = vpack.c.b16 %v378, %v376
        %411 = vmatprep.subr.bf16.mxu0 %v380
        %412 = vmatpush1.bf16.msra.mxu0 %v379
        %413 = vmatprep.subr.bf16.mxu0 %v382
        %414 = vmatpush1.bf16.msra.mxu0 %v381
        %415 = vmatprep.subr.bf16.mxu0 %v384
        %416 = vmatpush1.bf16.msra.mxu0 %v383
        %417 = vmatprep.subr.bf16.mxu0 %v386
        %418 = vmatpush1.bf16.msra.mxu0 %v385
        %419 = vmatprep.subr.bf16.mxu0 %v388
        %420 = vmatpush1.bf16.msra.mxu0 %v387
        %421 = vmatprep.subr.bf16.mxu0 %v390
        %422 = vmatpush1.bf16.msra.mxu0 %v389
        %423 = vmatprep.subr.bf16.mxu0 %v392
        %424 = vmatpush1.bf16.msra.mxu0 %v391
        %425 = vmatprep.subr.bf16.mxu0 %v394
        %426 = vmatpush1.bf16.msra.mxu0 %v393
        %427 = vmatprep.subr.bf16.mxu0 0
        %428 = vmatpush1.bf16.msra.mxu0 0
        %429 = vmatprep.subr.bf16.mxu0 0
        %430 = vmatpush1.bf16.msra.mxu0 0
        %431 = vmatprep.subr.bf16.mxu0 0
        %432 = vmatpush1.bf16.msra.mxu0 0
        %433 = vmatprep.subr.bf16.mxu0 0
        %434 = vmatpush1.bf16.msra.mxu0 0
        %435 = vmatprep.subr.bf16.mxu0 0
        %436 = vmatpush1.bf16.msra.mxu0 0
        %437 = vmatprep.subr.bf16.mxu0 0
        %438 = vmatpush1.bf16.msra.mxu0 0
        %439 = vmatprep.subr.bf16.mxu0 0
        %440 = vmatpush1.bf16.msra.mxu0 0
        %441 = vmatprep.subr.bf16.mxu0 0
        %442 = vmatpush1.bf16.msra.mxu0 0
        %443 = vmatprep.mubr.bf16.mxu0 0
        %444 = vmatmul.mubr.bf16.gmra.mrb[0].mxu0 %v329
        %v445 = vpop.f32.mrb[0].mxu0
        %v446 = vadd.f32 0.0, %v445
        %v447 = vpop.f32.mrb[0].mxu0
        %v448 = vadd.f32 0.0, %v447
        %v449 = vpop.f32.mrb[0].mxu0
        %v450 = vadd.f32 0.0, %v449
        %v451 = vpop.f32.mrb[0].mxu0
        %v452 = vadd.f32 0.0, %v451
        %453 = vdwg.mxu0
        %v454 = vadd.f32 %v305, %v446
        %v455 = vadd.f32 %v306, %v448
        %v456 = vadd.f32 %v307, %v450
        %v457 = vadd.f32 %v308, %v452
        %458 = vst [vmem:[#allocation2] sm:$0xff] %v454
        %459 = vst [vmem:[#allocation2 + $0x8] sm:$0xff] %v455
        %460 = vst [vmem:[#allocation2 + $0x10] sm:$0xff] %v456
        %461 = vst [vmem:[#allocation2 + $0x18] sm:$0xff] %v457
        %v462 = vld [vmem:[#allocation3] sm:$0xff]
        %v463 = vld [vmem:[#allocation3 + $0x8] sm:$0xff]
        %v464 = vld [vmem:[#allocation3 + $0x10] sm:$0xff]
        %v465 = vld [vmem:[#allocation3 + $0x18] sm:$0xff]
        %v466 = vld [vmem:[%s255] sm:$0xff]
        %v467 = vld [vmem:[%s255 + $0x8] sm:$0xff]
        %v468 = vld [vmem:[%s255 + $0x10] sm:$0xff]
        %v469 = vld [vmem:[%s255 + $0x18] sm:$0xff]
        %v470 = vld [vmem:[%s255 + $0x20] sm:$0xff]
        %v471 = vld [vmem:[%s255 + $0x28] sm:$0xff]
        %v472 = vld [vmem:[%s255 + $0x30] sm:$0xff]
        %v473 = vld [vmem:[%s255 + $0x38] sm:$0xff]
        %v474 = vld [vmem:[%s255 + $0x40] sm:$0xff]
        %v475 = vld [vmem:[%s255 + $0x48] sm:$0xff]
        %v476 = vld [vmem:[%s255 + $0x50] sm:$0xff]
        %v477 = vld [vmem:[%s255 + $0x58] sm:$0xff]
        %v478 = vld [vmem:[%s255 + $0x60] sm:$0xff]
        %v479 = vld [vmem:[%s255 + $0x68] sm:$0xff]
        %v480 = vld [vmem:[%s255 + $0x70] sm:$0xff]
        %v481 = vld [vmem:[%s255 + $0x78] sm:$0xff]
        %v498 = vunpack.c.l.b16 %v466
        %v499 = vunpack.c.h.b16 %v466
        %v500 = vunpack.c.l.b16 %v467
        %v501 = vunpack.c.h.b16 %v467
        %v502 = vunpack.c.l.b16 %v468
        %v503 = vunpack.c.h.b16 %v468
        %v504 = vunpack.c.l.b16 %v469
        %v505 = vunpack.c.h.b16 %v469
        %v506 = vunpack.c.l.b16 %v470
        %v507 = vunpack.c.h.b16 %v470
        %v508 = vunpack.c.l.b16 %v471
        %v509 = vunpack.c.h.b16 %v471
        %v510 = vunpack.c.l.b16 %v472
        %v511 = vunpack.c.h.b16 %v472
        %v512 = vunpack.c.l.b16 %v473
        %v513 = vunpack.c.h.b16 %v473
        %v514 = vunpack.c.l.b16 %v474
        %v515 = vunpack.c.h.b16 %v474
        %v516 = vunpack.c.l.b16 %v475
        %v517 = vunpack.c.h.b16 %v475
        %v518 = vunpack.c.l.b16 %v476
        %v519 = vunpack.c.h.b16 %v476
        %v520 = vunpack.c.l.b16 %v477
        %v521 = vunpack.c.h.b16 %v477
        %v522 = vunpack.c.l.b16 %v478
        %v523 = vunpack.c.h.b16 %v478
        %v524 = vunpack.c.l.b16 %v479
        %v525 = vunpack.c.h.b16 %v479
        %v526 = vunpack.c.l.b16 %v480
        %v527 = vunpack.c.h.b16 %v480
        %v528 = vunpack.c.l.b16 %v481
        %v529 = vunpack.c.h.b16 %v481
        %v530 = vpack.c.b16 %v500, %v498
        %v531 = vpack.c.b16 %v501, %v499
        %v532 = vpack.c.b16 %v504, %v502
        %v533 = vpack.c.b16 %v505, %v503
        %v534 = vpack.c.b16 %v508, %v506
        %v535 = vpack.c.b16 %v509, %v507
        %v536 = vpack.c.b16 %v512, %v510
        %v537 = vpack.c.b16 %v513, %v511
        %v538 = vpack.c.b16 %v516, %v514
        %v539 = vpack.c.b16 %v517, %v515
        %v540 = vpack.c.b16 %v520, %v518
        %v541 = vpack.c.b16 %v521, %v519
        %v542 = vpack.c.b16 %v524, %v522
        %v543 = vpack.c.b16 %v525, %v523
        %v544 = vpack.c.b16 %v528, %v526
        %v545 = vpack.c.b16 %v529, %v527
        %562 = vmatprep.subr.bf16.mxu0 %v531
        %563 = vmatpush1.bf16.msra.mxu0 %v530
        %564 = vmatprep.subr.bf16.mxu0 %v533
        %565 = vmatpush1.bf16.msra.mxu0 %v532
        %566 = vmatprep.subr.bf16.mxu0 %v535
        %567 = vmatpush1.bf16.msra.mxu0 %v534
        %568 = vmatprep.subr.bf16.mxu0 %v537
        %569 = vmatpush1.bf16.msra.mxu0 %v536
        %570 = vmatprep.subr.bf16.mxu0 %v539
        %571 = vmatpush1.bf16.msra.mxu0 %v538
        %572 = vmatprep.subr.bf16.mxu0 %v541
        %573 = vmatpush1.bf16.msra.mxu0 %v540
        %574 = vmatprep.subr.bf16.mxu0 %v543
        %575 = vmatpush1.bf16.msra.mxu0 %v542
        %576 = vmatprep.subr.bf16.mxu0 %v545
        %577 = vmatpush1.bf16.msra.mxu0 %v544
        %578 = vmatprep.subr.bf16.mxu0 0
        %579 = vmatpush1.bf16.msra.mxu0 0
        %580 = vmatprep.subr.bf16.mxu0 0
        %581 = vmatpush1.bf16.msra.mxu0 0
        %582 = vmatprep.subr.bf16.mxu0 0
        %583 = vmatpush1.bf16.msra.mxu0 0
        %584 = vmatprep.subr.bf16.mxu0 0
        %585 = vmatpush1.bf16.msra.mxu0 0
        %586 = vmatprep.subr.bf16.mxu0 0
        %587 = vmatpush1.bf16.msra.mxu0 0
        %588 = vmatprep.subr.bf16.mxu0 0
        %589 = vmatpush1.bf16.msra.mxu0 0
        %590 = vmatprep.subr.bf16.mxu0 0
        %591 = vmatpush1.bf16.msra.mxu0 0
        %592 = vmatprep.subr.bf16.mxu0 0
        %593 = vmatpush1.bf16.msra.mxu0 0
        %594 = vmatprep.mubr.bf16.mxu0 0
        %595 = vmatmul.mubr.bf16.gmra.mrb[0].mxu0 %v329
        %v596 = vpop.f32.mrb[0].mxu0
        %v597 = vadd.f32 0.0, %v596
        %v598 = vpop.f32.mrb[0].mxu0
        %v599 = vadd.f32 0.0, %v598
        %v600 = vpop.f32.mrb[0].mxu0
        %v601 = vadd.f32 0.0, %v600
        %v602 = vpop.f32.mrb[0].mxu0
        %v603 = vadd.f32 0.0, %v602
        %604 = vdwg.mxu0
        %v605 = vadd.f32 %v462, %v597
        %v606 = vadd.f32 %v463, %v599
        %v607 = vadd.f32 %v464, %v601
        %v608 = vadd.f32 %v465, %v603
        %609 = vst [vmem:[#allocation3] sm:$0xff] %v605
        %610 = vst [vmem:[#allocation3 + $0x8] sm:$0xff] %v606
        %611 = vst [vmem:[#allocation3 + $0x10] sm:$0xff] %v607
        %612 = vst [vmem:[#allocation3 + $0x18] sm:$0xff] %v608
        // Predicated region
        $region49: #{tpu_custom_call.1} parent=31 // pred_check
          %p613 = pneg %p291
        $region50: #{tpu_custom_call.1} parent=31 // pred_check_branch
          %615 = sbr.rel (%p613) target = $region52
        $region51: #{tpu_custom_call.1} parent=31 // pred_region
          %v616 = vld [vmem:[#allocation2] sm:$0xff]
          %v617 = vld [vmem:[#allocation2 + $0x8] sm:$0xff]
          %v618 = vld [vmem:[#allocation2 + $0x10] sm:$0xff]
          %v619 = vld [vmem:[#allocation2 + $0x18] sm:$0xff]
          %v620 = vxor.u32 %v616, 2147483648
          %v621 = vxor.u32 %v617, 2147483648
          %v622 = vxor.u32 %v618, 2147483648
          %v623 = vxor.u32 %v619, 2147483648
          %v624 = vmul.f32 %v620, 1.442695
          %v625 = vpow.pop %v624
          %v626 = vmul.f32 %v621, 1.442695
          %v627 = vpow.pop %v626
          %v628 = vmul.f32 %v622, 1.442695
          %v629 = vpow.pop %v628
          %v630 = vmul.f32 %v623, 1.442695
          %v631 = vpow.pop %v630
          %v632 = vadd.f32 %v625, 1.0
          %v633 = vadd.f32 %v627, 1.0
          %v634 = vadd.f32 %v629, 1.0
          %v635 = vadd.f32 %v631, 1.0
          %v636 = vrcp.pop %v632
          %v637 = vmul.f32 1.0, %v636
          %v638 = vrcp.pop %v633
          %v639 = vmul.f32 1.0, %v638
          %v640 = vrcp.pop %v634
          %v641 = vmul.f32 1.0, %v640
          %v642 = vrcp.pop %v635
          %v643 = vmul.f32 1.0, %v642
          %v644 = vmul.f32 %v616, %v637
          %v645 = vmul.f32 %v617, %v639
          %v646 = vmul.f32 %v618, %v641
          %v647 = vmul.f32 %v619, %v643
          %v648 = vld [vmem:[#allocation3] sm:$0xff]
          %v649 = vld [vmem:[#allocation3 + $0x8] sm:$0xff]
          %v650 = vld [vmem:[#allocation3 + $0x10] sm:$0xff]
          %v651 = vld [vmem:[#allocation3 + $0x18] sm:$0xff]
          %v652 = vmul.f32 %v644, %v648
          %v653 = vmul.f32 %v645, %v649
          %v654 = vmul.f32 %v646, %v650
          %v655 = vmul.f32 %v647, %v651
          %v656 = vpack.c.bf16 %v654, %v652
          %v657 = vpack.c.bf16 %v655, %v653
          %v660 = vunpack.c.l.b16 %v656
          %v661 = vunpack.c.l.b16 %v657
          %v662 = vunpack.c.h.b16 %v656
          %v663 = vunpack.c.h.b16 %v657
          %v664 = vpack.c.b16 %v661, %v660
          %v665 = vpack.c.b16 %v663, %v662
          %668 = vst [vmem:[%s282] sm:$0xff] %v664
          %669 = vst [vmem:[%s282 + $0x8] sm:$0xff] %v665
        $region52: #{tpu_custom_call.1} parent=31 // pred_fallthru
          _
        %s670 = sand.u32 %s134, 1
        %s671 = scalar_lea.sflag [#allocation6], %s670
        %s672 = sand.u32 %s134, 1
        %s673 = smul.addr %s672, 16
        %s674 = scalar_lea.vmem [#allocation10], %s673
        // Predicated region
        $region53: #{tpu_custom_call.1} parent=31 // pred_check
          %p675 = pneg %p144
        $region54: #{tpu_custom_call.1} parent=31 // pred_check_branch
          %677 = sbr.rel (%p675) target = $region56
        $region55: #{tpu_custom_call.1} parent=31 // pred_region
          %s678 = smul.u32 2, %s26
          %s679 = smul.u32 2, %s27
          %s681 = ssub.s32 256, 256
          %682 = vsyncadd %s671, %s681
          %s683 = smul.addr %s678, 4
          %s684 = sadd.s32 %s679, %s683
          %s685 = smul.addr %s684, 64
          %s686 = scalar_lea.hbm %s3, %s685
          %s687 = sshll.u32 %s674, 4
          %s688 = int_to_ptr.vmem [resolvable:$true] %s687
          %693 = dma.vmem_to_hbm [thread:$0]  %s688, 256, %s686, %s671, 128, 256, 8
        $region56: #{tpu_custom_call.1} parent=31 // pred_fallthru
          _
      $region32: #{tpu_custom_call.1} parent=5 // pred_fallthru
        _
      %p694 = scmp.le.s32.totalorder 2, %s16
      // Predicated region
      $region57: #{tpu_custom_call.1} parent=5 // pred_check
        %p695 = pneg %p694
      $region58: #{tpu_custom_call.1} parent=5 // pred_check_branch
        %697 = sbr.rel (%p695) target = $region60
      $region59: #{tpu_custom_call.1} parent=5 // pred_region
        %s698 = ssub.s32 %s16, 2
        // Predicated region
        $region61: #{tpu_custom_call.1} parent=59 // pred_check
          %p699 = pneg %p150
        $region62: #{tpu_custom_call.1} parent=59 // pred_check_branch
          %701 = sbr.rel (%p699) target = $region64
        $region63: #{tpu_custom_call.1} parent=59 // pred_region
          %s702 = sand.u32 %s135, 1
          %s703 = scalar_lea.sflag [#allocation6], %s702
          %s704 = sand.u32 %s135, 1
          %s705 = smul.addr %s704, 16
          %s706 = scalar_lea.vmem [#allocation10], %s705
          %707 = dma.done %s703, 256
        $region64: #{tpu_custom_call.1} parent=59 // pred_fallthru
          _
      $region60: #{tpu_custom_call.1} parent=5 // pred_fallthru
        _
    $region6: #{tpu_custom_call.1} parent=1 // loop_footer
      %s20 = sadd.s32 1, %s16
    $region7: #{tpu_custom_call.1} parent=1 // loop_footer_branch
      %15 = sbr.rel target = $region3
    $region8: #{tpu_custom_call.1} parent=1 // loop_exit
      _
    %708 = vsyncpa [#allocation5], 1
    %s709 = scalar_lea.sflag [#allocation5], 1
    %710 = vsyncpa %s709, 1
    %711 = vsyncpa [#allocation8], 1
    %s712 = scalar_lea.sflag [#allocation8], 1
    %713 = vsyncpa %s712, 1
    %714 = vsyncpa [#allocation6], 1
    %s715 = scalar_lea.sflag [#allocation6], 1
    %716 = vsyncpa %s715, 1

</llo_original>
